<compile_context>
chip_gen: v7x
topology: tpu7x:2x2x1
jax: 0.10.0
libtpu: 0.0.40
codegen_flags: <defaults>
</compile_context>

<pallas_src>
import math

import jax
import jax.numpy as jnp
from jax.experimental import pallas as pl
from jax.experimental.pallas import tpu as pltpu


# -----------------------------------------------------------------------------
# Glue (plain JAX): real spherical-harmonics basis, returned TRANSPOSED as
# Y^T[..., lm, n] with lm = (l, m) packed as l*(l+1)+m, shape (B, (lmax+1)^2, N).
# Building it transposed keeps the big N axis on the lane dimension downstream.
# -----------------------------------------------------------------------------
def real_spherical_harmonics_t(theta, phi, lmax):
    x = jnp.cos(theta)                 # cos(theta)
    s = jnp.sin(theta)                 # sqrt(1 - x^2) for theta in [0, pi]

    # Associated Legendre P_l^m via standard recursions (Condon-Shortley phase).
    P = {(0, 0): jnp.ones_like(x)}
    for m in range(1, lmax + 1):
        P[(m, m)] = -(2 * m - 1) * s * P[(m - 1, m - 1)]
    for m in range(0, lmax):
        P[(m + 1, m)] = (2 * m + 1) * x * P[(m, m)]
    for m in range(0, lmax + 1):
        for l in range(m + 2, lmax + 1):
            P[(l, m)] = ((2 * l - 1) * x * P[(l - 1, m)]
                         - (l + m - 1) * P[(l - 2, m)]) / (l - m)

    rows = []
    for l in range(lmax + 1):
        for m in range(-l, l + 1):
            am = abs(m)
            # TODO(synk): factorial-ratio normalization is fine at lmax=3 but
            # should switch to log-gamma if lmax scales beyond ~30.
            K = math.sqrt((2 * l + 1) / (4 * math.pi)
                          * math.factorial(l - am) / math.factorial(l + am))
            if m == 0:
                row = K * P[(l, 0)]
            elif m > 0:
                row = math.sqrt(2.0) * K * jnp.cos(m * phi) * P[(l, m)]
            else:
                row = math.sqrt(2.0) * K * jnp.sin(am * phi) * P[(l, am)]
            rows.append(row)                       # each (B, N)
    return jnp.stack(rows, axis=-2)                # (B, (lmax+1)^2, N)


# -----------------------------------------------------------------------------
# Pallas kernel: fused SFT -> ISFT on a batch-block of `bb` elements.
#   y_ref   : (bb, L, N)  harmonics basis (shared by analysis and synthesis)
#   a_ref   : (bb, 1, N)  quadrature weights (area), lane-dense
#   d_ref   : (bb, C, N)  point data, channel-major / lane-dense in N
#   out_ref : (bb, C, N)  reconstructed point data
# -----------------------------------------------------------------------------
def sft_isft_kernel(y_ref, a_ref, d_ref, out_ref):
    y = y_ref[...]                                 # (bb, L, N)
    a = a_ref[...]                                 # (bb, 1, N)
    d = d_ref[...]                                 # (bb, C, N)

    # Fold quadrature weights into the data (C*N VPU mul, C << L, hidden
    # under the MXU work).
    dw = d * a                                     # (bb, C, N)

    # SphericalFT:  f[b, c, lm] = sum_n data[b, c, n] * area[b, n] * Y[b, lm, n]
    # Contract the minor N axis of both operands -> MXU dot, no XLU transpose.
    sdata = jnp.einsum('bcn,bln->bcl', dw, y,
                       preferred_element_type=jnp.float32)       # (bb, C, L)

    # InverseSphericalFT:  out[b, c, n] = sum_lm f[b, c, lm] * Y[b, lm, n]
    out = jnp.einsum('bcl,bln->bcn', sdata, y,
                     preferred_element_type=jnp.float32)         # (bb, C, N)

    out_ref[...] = out.astype(out_ref.dtype)       # lane-dense (N=128) stores


def _batch_block_size(B):
    """Batch elements per grid step: collapse the grid on single-TC chips."""
    try:
        kind = jax.devices()[0].device_kind.lower()
    except Exception:  # pragma: no cover - defensive
        kind = ""
    # v7x has 2 TensorCores per chip: keep grid=(B,) parallel so the batch
    # elements shard across cores. v5e/v6e have 1 TC: the grid is a serial
    # loop, so run everything in a single invocation.
    if "v7" in kind or "tpu7" in kind:
        return 1
    return B


def spherical_conv_unet_forward(r, theta, phi, area, data, lmax):
    """Mirrors SphericalConvUNet.forward: returns (r, theta, phi, area, out)."""
    B, N, C = data.shape
    L = (lmax + 1) ** 2

    # Basis evaluation (cheap per-point polynomial glue) in plain JAX, built
    # transposed so N sits on the lane axis.
    Yt = real_spherical_harmonics_t(theta, phi, lmax).astype(jnp.float32)  # (B, L, N)
    area3 = area.astype(jnp.float32)[:, None, :]                           # (B, 1, N)
    data_t = jnp.swapaxes(data, 1, 2).astype(jnp.float32)                  # (B, C, N)

    bb = _batch_block_size(B)
    grid = (B // bb,)

    # Advisory cost hint: two matmuls of 2*N*L*C flops each, plus the C*N
    # weight fold, per batch element.
    cost = pl.CostEstimate(
        flops=4 * B * N * L * C + B * C * N,
        transcendentals=0,
        bytes_accessed=4 * (B * L * N + B * N + 2 * B * C * N),
    )

    out_t = pl.pallas_call(
        sft_isft_kernel,
        out_shape=jax.ShapeDtypeStruct((B, C, N), data.dtype),
        grid_spec=pltpu.PrefetchScalarGridSpec(
            num_scalar_prefetch=0,
            grid=grid,
            in_specs=[
                pl.BlockSpec((bb, L, N), lambda b: (b, 0, 0)),
                pl.BlockSpec((bb, 1, N), lambda b: (b, 0, 0)),
                pl.BlockSpec((bb, C, N), lambda b: (b, 0, 0)),
            ],
            out_specs=pl.BlockSpec((bb, C, N), lambda b: (b, 0, 0)),
        ),
        compiler_params=pltpu.CompilerParams(
            dimension_semantics=("parallel",)),
        cost_estimate=cost,
    )(Yt, area3, data_t)

    out = jnp.swapaxes(out_t, 1, 2)                # back to (B, N, C)
    return r, theta, phi, area, out


if __name__ == "__main__":
    # Small, module-consistent shapes: B=2 batches, N=128 scattered points,
    # C=4 channels, lmax=3 -> L=16 spherical-harmonic coefficients.
    B, N, C, LMAX = 2, 128, 4, 3

    key = jax.random.PRNGKey(0)
    k1, k2, k3, k4 = jax.random.split(key, 4)
    theta = jax.random.uniform(k1, (B, N), dtype=jnp.float32,
                               minval=1e-3, maxval=math.pi - 1e-3)
    phi = jax.random.uniform(k2, (B, N), dtype=jnp.float32,
                             minval=0.0, maxval=2.0 * math.pi)
    data = jax.random.normal(k3, (B, N, C), dtype=jnp.float32)
    r = jax.random.normal(k4, (B, N), dtype=jnp.float32)
    # Quadrature weights (uniform area elements summing to 4*pi).
    area = jnp.full((B, N), 4.0 * math.pi / N, dtype=jnp.float32)

    r_o, th_o, ph_o, ar_o, out = spherical_conv_unet_forward(
        r, theta, phi, area, data, lmax=LMAX)
    out = jax.block_until_ready(out)

    # Pure-JAX reference check of the fused SFT -> ISFT path (original layout).
    Yt_ref = real_spherical_harmonics_t(theta, phi, LMAX).astype(jnp.float32)
    Y_ref = jnp.swapaxes(Yt_ref, 1, 2)                                # (B, N, L)
    sdata_ref = jnp.einsum('bnl,bnc->blc', Y_ref, area[..., None] * data)
    out_ref = jnp.einsum('bnl,blc->bnc', Y_ref, sdata_ref)
    assert out.shape == (B, N, C)
    assert jnp.allclose(out, out_ref, rtol=1e-4, atol=1e-4)

    # Pass-through outputs are returned unchanged, as in the PyTorch forward.
    assert r_o is r and th_o is theta and ph_o is phi and ar_o is area

    # TODO(synk): SphericalConv / SphericalConvBlock / BatchNorm1d layers are
    # instantiated in __init__ but never invoked by this forward pass, so they
    # are intentionally not materialized here.
    print("KERNEL_OK")
</pallas_src>

<mosaic_0001>
module attributes {stable_mosaic.version = 11 : i64} {
  func.func @sft_isft_kernel(%arg0: i32, %arg1: memref<2x16x128xf32, #tpu.memory_space<vmem>>, %arg2: memref<2x1x128xf32, #tpu.memory_space<vmem>>, %arg3: memref<2x4x128xf32, #tpu.memory_space<vmem>>, %arg4: memref<2x4x128xf32, #tpu.memory_space<vmem>>) attributes {dimension_semantics = [#tpu.dimension_semantics<parallel>], iteration_bounds = array<i64: 1>, scalar_prefetch = 0 : i64, scratch_operands = 0 : i64, tpu.core_type = #tpu.core_type<tc>, window_params = [{transform_indices = @transform_0, window_bounds = array<i64: 2, 16, 128>}, {transform_indices = @transform_1, window_bounds = array<i64: 2, 1, 128>}, {transform_indices = @transform_2, window_bounds = array<i64: 2, 4, 128>}, {transform_indices = @transform_3, window_bounds = array<i64: 2, 4, 128>}]} {
    %c0 = arith.constant 0 : index
    %c0_0 = arith.constant 0 : index
    %c0_1 = arith.constant 0 : index
    %0 = vector.load %arg1[%c0, %c0_0, %c0_1] : memref<2x16x128xf32, #tpu.memory_space<vmem>>, vector<2x16x128xf32>
    %c0_2 = arith.constant 0 : index
    %c0_3 = arith.constant 0 : index
    %c0_4 = arith.constant 0 : index
    %1 = vector.load %arg2[%c0_2, %c0_3, %c0_4] : memref<2x1x128xf32, #tpu.memory_space<vmem>>, vector<2x1x128xf32>
    %c0_5 = arith.constant 0 : index
    %c0_6 = arith.constant 0 : index
    %c0_7 = arith.constant 0 : index
    %2 = vector.load %arg3[%c0_5, %c0_6, %c0_7] : memref<2x4x128xf32, #tpu.memory_space<vmem>>, vector<2x4x128xf32>
    %3 = vector.broadcast %1 : vector<2x1x128xf32> to vector<2x4x128xf32>
    %4 = arith.mulf %2, %3 : vector<2x4x128xf32>
    "tpu.trace_start"() <{level = 10 : i32, message = "bcn,bln->bcl"}> : () -> ()
    %cst = arith.constant dense<0.000000e+00> : vector<2x4x16xf32>
    %5 = tpu.matmul %4, %0, %cst {dimension_numbers = #tpu.dot_dimension_numbers<[2], [2], [1], [1], [0, 0, 0, 1, 1, 1], [0], [0]>} : vector<2x4x128xf32>, vector<2x16x128xf32>, vector<2x4x16xf32> -> vector<2x4x16xf32>
    "tpu.trace_stop"() : () -> ()
    "tpu.trace_start"() <{level = 10 : i32, message = "bcl,bln->bcn"}> : () -> ()
    %cst_8 = arith.constant dense<0.000000e+00> : vector<2x4x128xf32>
    %6 = tpu.matmul %5, %0, %cst_8 {dimension_numbers = #tpu.dot_dimension_numbers<[2], [1], [1], [2], [0, 0, 0, 1, 1, 2], [0], [0]>} : vector<2x4x16xf32>, vector<2x16x128xf32>, vector<2x4x128xf32> -> vector<2x4x128xf32>
    "tpu.trace_stop"() : () -> ()
    %c0_9 = arith.constant 0 : index
    %c0_10 = arith.constant 0 : index
    %c0_11 = arith.constant 0 : index
    %7 = vector.load %arg4[%c0_9, %c0_10, %c0_11] : memref<2x4x128xf32, #tpu.memory_space<vmem>>, vector<2x4x128xf32>
    tpu.vector_store %arg4[%c0_9, %c0_10, %c0_11], %6 {strides = array<i32>} : memref<2x4x128xf32, #tpu.memory_space<vmem>>, vector<2x4x128xf32>,
    return
  }
  func.func @transform_0(%arg0: i32) -> (i32, i32, i32) {
    %c0_i32 = arith.constant 0 : i32
    %c0_i32_0 = arith.constant 0 : i32
    %c0_i32_1 = arith.constant 0 : i32
    return %arg0, %c0_i32, %c0_i32_0 : i32, i32, i32
  }
  func.func @transform_1(%arg0: i32) -> (i32, i32, i32) {
    %c0_i32 = arith.constant 0 : i32
    %c0_i32_0 = arith.constant 0 : i32
    %c0_i32_1 = arith.constant 0 : i32
    return %arg0, %c0_i32, %c0_i32_0 : i32, i32, i32
  }
  func.func @transform_2(%arg0: i32) -> (i32, i32, i32) {
    %c0_i32 = arith.constant 0 : i32
    %c0_i32_0 = arith.constant 0 : i32
    %c0_i32_1 = arith.constant 0 : i32
    return %arg0, %c0_i32, %c0_i32_0 : i32, i32, i32
  }
  func.func @transform_3(%arg0: i32) -> (i32, i32, i32) {
    %c0_i32 = arith.constant 0 : i32
    %c0_i32_0 = arith.constant 0 : i32
    %c0_i32_1 = arith.constant 0 : i32
    return %arg0, %c0_i32, %c0_i32_0 : i32, i32, i32
  }
}

</mosaic_0001>

<llo_original>
// kernel: tpu_custom_call.1
$region0: #{tpu_custom_call.1}
  #allocation0 [shape = 'u32[]', space=smem, size = 0x4, offset = 0x4, fixed_abs, tag = 'smem constant byte address 0x4 - core index']
  #allocation1 [shape = 'u32[144,128]{1,0:T(1,128)}', space=vmem, size = 0x12000, scoped, tag = 'internal scratch']
  %s0 = inlined_call_operand.hbm [shape: f32[2,16,128], index: 0, kind: input, shape index: {}]
  %s1 = inlined_call_operand.vmem [shape: f32[2,1,128], index: 1, kind: input, shape index: {}]
  %s2 = inlined_call_operand.hbm [shape: f32[2,4,128], index: 2, kind: input, shape index: {}]
  %s3 = inlined_call_operand.hbm [shape: f32[2,4,128], index: 3, kind: output, shape index: {}]
  %s4 = sld [smem:[#allocation0]]
  $region30: #{tpu_custom_call.1} parent=0
    _
  %s6 = ssub.s32 1, %s4
  %s7 = scalar_select 0, %s6, %s4
  $region1: #{tpu_custom_call.1} parent=0
    #allocation2 [shape = 'u8[16384]{0}', space=vmem, size = 0x4000, scoped, tag = 'input window, operand 0, single buffered']
    #allocation3 [shape = 's32[1]{0}', space=sflag, size = 0x4, scoped, tag = 'scoped memory for tpu_custom_call.1']
    #allocation4 [shape = 's32[1]{0}', space=sflag, size = 0x4, scoped, tag = 'scoped memory for tpu_custom_call.1']
    #allocation5 [shape = 'u8[4096]{0}', space=vmem, size = 0x1000, scoped, tag = 'input window, operand 2, single buffered']
    #allocation6 [shape = 's32[1]{0}', space=sflag, size = 0x4, scoped, tag = 'scoped memory for tpu_custom_call.1']
    #allocation7 [shape = 'u8[4096]{0}', space=vmem, size = 0x1000, scoped, tag = 'output window, operand 0, single buffered']
    %8 = vsyncpa [#allocation3], 0
    %9 = vsyncpa [#allocation6], 0
    %10 = vsyncpa [#allocation4], 0
    // Predicated region
    $region2: #{tpu_custom_call.1} parent=1 // pred_check
      _
    $region3: #{tpu_custom_call.1} parent=1 // pred_check_branch
      %12 = sbr.rel (0) target = $region5
    $region4: #{tpu_custom_call.1} parent=1 // pred_region
      %s14 = ssub.s32 512, 512
      %15 = vsyncadd [#allocation3], %s14
      %s16 = sshll.u32 [#allocation2], 4
      %s17 = int_to_ptr.vmem [resolvable:$true] %s16
      %22 = dma.hbm_to_vmem [thread:$0]  %s0, 512, %s17, [#allocation3], 128, 128, 8
    $region5: #{tpu_custom_call.1} parent=1 // pred_fallthru
      _
    // Predicated region
    $region6: #{tpu_custom_call.1} parent=1 // pred_check
      _
    $region7: #{tpu_custom_call.1} parent=1 // pred_check_branch
      %24 = sbr.rel (0) target = $region9
    $region8: #{tpu_custom_call.1} parent=1 // pred_region
      _
    $region9: #{tpu_custom_call.1} parent=1 // pred_fallthru
      _
    // Predicated region
    $region10: #{tpu_custom_call.1} parent=1 // pred_check
      _
    $region11: #{tpu_custom_call.1} parent=1 // pred_check_branch
      %26 = sbr.rel (0) target = $region13
    $region12: #{tpu_custom_call.1} parent=1 // pred_region
      %s28 = ssub.s32 128, 128
      %29 = vsyncadd [#allocation6], %s28
      %s30 = sshll.u32 [#allocation5], 4
      %s31 = int_to_ptr.vmem [resolvable:$true] %s30
      %36 = dma.hbm_to_vmem [thread:$0]  %s2, 128, %s31, [#allocation6], 64, 64, 4
    $region13: #{tpu_custom_call.1} parent=1 // pred_fallthru
      _
    // Predicated region
    $region14: #{tpu_custom_call.1} parent=1 // pred_check
      _
    $region15: #{tpu_custom_call.1} parent=1 // pred_check_branch
      %38 = sbr.rel (0) target = $region17
    $region16: #{tpu_custom_call.1} parent=1 // pred_region
      %39 = dma.done [#allocation3], 512
    $region17: #{tpu_custom_call.1} parent=1 // pred_fallthru
      _
    // Predicated region
    $region18: #{tpu_custom_call.1} parent=1 // pred_check
      _
    $region19: #{tpu_custom_call.1} parent=1 // pred_check_branch
      %41 = sbr.rel (0) target = $region21
    $region20: #{tpu_custom_call.1} parent=1 // pred_region
      %42 = dma.done [#allocation6], 128
    $region21: #{tpu_custom_call.1} parent=1 // pred_fallthru
      _
    %v43 = vld [vmem:[#allocation2] sm:$0xff]
    %v44 = vld [vmem:[#allocation2 + $0x8] sm:$0xff]
    %v45 = vld [vmem:[#allocation2 + $0x10] sm:$0xff]
    %v46 = vld [vmem:[#allocation2 + $0x18] sm:$0xff]
    %v47 = vld [vmem:[%s1] sm:$0x1]
    %v48 = vld [vmem:[%s1 + $0x1] sm:$0x1]
    %v49 = vld [vmem:[#allocation5] sm:$0xf]
    %v50 = vld [vmem:[#allocation5 + $0x4] sm:$0xf]
    %v53 = vlaneseq
    %v54 = vshrl.u32 %v53, 7
    %v55 = vsub.s32 0, %v54
    %v56 = vrot.slane %v47, %v55
    %v57 = vlaneseq
    %v58 = vshrl.u32 %v57, 7
    %v59 = vsub.s32 0, %v58
    %v60 = vrot.slane %v48, %v59
    %v63 = vmul.f32 %v49, %v56
    %v64 = vmul.f32 %v50, %v60
    %65 = vmatprep.subr.mxu0 0.0
    %66 = vmatpush1.xpose.msra.mxu0 %v43
    %67 = vmatprep.subr.mxu0 0.0
    %68 = vmatpush1.xpose.msra.mxu0 %v44
    %69 = vmatprep.subr.mxu0 0.0
    %70 = vmatpush1.xpose.msra.mxu0 0.0
    %71 = vmatprep.subr.mxu0 0.0
    %72 = vmatpush1.xpose.msra.mxu0 0.0
    %73 = vmatprep.subr.mxu0 0.0
    %74 = vmatpush1.xpose.msra.mxu0 0.0
    %75 = vmatprep.subr.mxu0 0.0
    %76 = vmatpush1.xpose.msra.mxu0 0.0
    %77 = vmatprep.subr.mxu0 0.0
    %78 = vmatpush1.xpose.msra.mxu0 0.0
    %79 = vmatprep.subr.mxu0 0.0
    %80 = vmatpush1.xpose.msra.mxu0 0.0
    %81 = vmatprep.subr.mxu0 0.0
    %82 = vmatpush1.xpose.msra.mxu0 0.0
    %83 = vmatprep.subr.mxu0 0.0
    %84 = vmatpush1.xpose.msra.mxu0 0.0
    %85 = vmatprep.subr.mxu0 0.0
    %86 = vmatpush1.xpose.msra.mxu0 0.0
    %87 = vmatprep.subr.mxu0 0.0
    %88 = vmatpush1.xpose.msra.mxu0 0.0
    %89 = vmatprep.subr.mxu0 0.0
    %90 = vmatpush1.xpose.msra.mxu0 0.0
    %91 = vmatprep.subr.mxu0 0.0
    %92 = vmatpush1.xpose.msra.mxu0 0.0
    %93 = vmatprep.subr.mxu0 0.0
    %94 = vmatpush1.xpose.msra.mxu0 0.0
    %95 = vmatprep.subr.mxu0 0.0
    %96 = vmatpush1.xpose.msra.mxu0 0.0
    %97 = vmatprep.subr.mxu0 0.0
    %98 = vmatpush1.xpose.msra.mxu0 0.0
    %99 = vmatprep.subr.mxu0 0.0
    %100 = vmatpush1.xpose.msra.mxu0 0.0
    %101 = vmatprep.subr.mxu0 0.0
    %102 = vmatpush1.xpose.msra.mxu0 0.0
    %103 = vmatprep.subr.mxu0 0.0
    %104 = vmatpush1.xpose.msra.mxu0 0.0
    %105 = vmatprep.subr.mxu0 0.0
    %106 = vmatpush1.xpose.msra.mxu0 0.0
    %107 = vmatprep.subr.mxu0 0.0
    %108 = vmatpush1.xpose.msra.mxu0 0.0
    %109 = vmatprep.subr.mxu0 0.0
    %110 = vmatpush1.xpose.msra.mxu0 0.0
    %111 = vmatprep.subr.mxu0 0.0
    %112 = vmatpush1.xpose.msra.mxu0 0.0
    %113 = vmatprep.subr.mxu0 0.0
    %114 = vmatpush1.xpose.msra.mxu0 0.0
    %115 = vmatprep.subr.mxu0 0.0
    %116 = vmatpush1.xpose.msra.mxu0 0.0
    %117 = vmatprep.subr.mxu0 0.0
    %118 = vmatpush1.xpose.msra.mxu0 0.0
    %119 = vmatprep.subr.mxu0 0.0
    %120 = vmatpush1.xpose.msra.mxu0 0.0
    %121 = vmatprep.subr.mxu0 0.0
    %122 = vmatpush1.xpose.msra.mxu0 0.0
    %123 = vmatprep.subr.mxu0 0.0
    %124 = vmatpush1.xpose.msra.mxu0 0.0
    %125 = vmatprep.subr.mxu0 0.0
    %126 = vmatpush1.xpose.msra.mxu0 0.0
    %127 = vmatprep.subr.mxu0 0.0
    %128 = vmatpush1.xpose.msra.mxu0 0.0
    %129 = vmatprep.mubr.f32.mxu0 0.0
    %130 = vmatmul.mubr.f32.gmra.mrb[0].mxu0 %v63
    %v131 = vpop.f32.mrb[0].mxu0
    %v132 = vadd.f32 0.0, %v131
    %v133 = vpop.f32.mrb[0].mxu0
    %134 = vdwg.mxu0
    %135 = vmatprep.subr.mxu0 0.0
    %136 = vmatpush1.xpose.msra.mxu0 %v45
    %137 = vmatprep.subr.mxu0 0.0
    %138 = vmatpush1.xpose.msra.mxu0 %v46
    %139 = vmatprep.subr.mxu0 0.0
    %140 = vmatpush1.xpose.msra.mxu0 0.0
    %141 = vmatprep.subr.mxu0 0.0
    %142 = vmatpush1.xpose.msra.mxu0 0.0
    %143 = vmatprep.subr.mxu0 0.0
    %144 = vmatpush1.xpose.msra.mxu0 0.0
    %145 = vmatprep.subr.mxu0 0.0
    %146 = vmatpush1.xpose.msra.mxu0 0.0
    %147 = vmatprep.subr.mxu0 0.0
    %148 = vmatpush1.xpose.msra.mxu0 0.0
    %149 = vmatprep.subr.mxu0 0.0
    %150 = vmatpush1.xpose.msra.mxu0 0.0
    %151 = vmatprep.subr.mxu0 0.0
    %152 = vmatpush1.xpose.msra.mxu0 0.0
    %153 = vmatprep.subr.mxu0 0.0
    %154 = vmatpush1.xpose.msra.mxu0 0.0
    %155 = vmatprep.subr.mxu0 0.0
    %156 = vmatpush1.xpose.msra.mxu0 0.0
    %157 = vmatprep.subr.mxu0 0.0
    %158 = vmatpush1.xpose.msra.mxu0 0.0
    %159 = vmatprep.subr.mxu0 0.0
    %160 = vmatpush1.xpose.msra.mxu0 0.0
    %161 = vmatprep.subr.mxu0 0.0
    %162 = vmatpush1.xpose.msra.mxu0 0.0
    %163 = vmatprep.subr.mxu0 0.0
    %164 = vmatpush1.xpose.msra.mxu0 0.0
    %165 = vmatprep.subr.mxu0 0.0
    %166 = vmatpush1.xpose.msra.mxu0 0.0
    %167 = vmatprep.subr.mxu0 0.0
    %168 = vmatpush1.xpose.msra.mxu0 0.0
    %169 = vmatprep.subr.mxu0 0.0
    %170 = vmatpush1.xpose.msra.mxu0 0.0
    %171 = vmatprep.subr.mxu0 0.0
    %172 = vmatpush1.xpose.msra.mxu0 0.0
    %173 = vmatprep.subr.mxu0 0.0
    %174 = vmatpush1.xpose.msra.mxu0 0.0
    %175 = vmatprep.subr.mxu0 0.0
    %176 = vmatpush1.xpose.msra.mxu0 0.0
    %177 = vmatprep.subr.mxu0 0.0
    %178 = vmatpush1.xpose.msra.mxu0 0.0
    %179 = vmatprep.subr.mxu0 0.0
    %180 = vmatpush1.xpose.msra.mxu0 0.0
    %181 = vmatprep.subr.mxu0 0.0
    %182 = vmatpush1.xpose.msra.mxu0 0.0
    %183 = vmatprep.subr.mxu0 0.0
    %184 = vmatpush1.xpose.msra.mxu0 0.0
    %185 = vmatprep.subr.mxu0 0.0
    %186 = vmatpush1.xpose.msra.mxu0 0.0
    %187 = vmatprep.subr.mxu0 0.0
    %188 = vmatpush1.xpose.msra.mxu0 0.0
    %189 = vmatprep.subr.mxu0 0.0
    %190 = vmatpush1.xpose.msra.mxu0 0.0
    %191 = vmatprep.subr.mxu0 0.0
    %192 = vmatpush1.xpose.msra.mxu0 0.0
    %193 = vmatprep.subr.mxu0 0.0
    %194 = vmatpush1.xpose.msra.mxu0 0.0
    %195 = vmatprep.subr.mxu0 0.0
    %196 = vmatpush1.xpose.msra.mxu0 0.0
    %197 = vmatprep.subr.mxu0 0.0
    %198 = vmatpush1.xpose.msra.mxu0 0.0
    %199 = vmatprep.mubr.f32.mxu0 0.0
    %200 = vmatmul.mubr.f32.gmra.mrb[0].mxu0 %v64
    %v201 = vpop.f32.mrb[0].mxu0
    %v202 = vadd.f32 0.0, %v201
    %v203 = vpop.f32.mrb[0].mxu0
    %204 = vdwg.mxu0
    %vm205 = vcmask 130048
    %v207 = vsel %vm205, %v132, 0
    %209 = vmatprep.subr.mxu0 0.0
    %210 = vmatpush1.msra.mxu0 %v43
    %211 = vmatprep.subr.mxu0 0.0
    %212 = vmatpush1.msra.mxu0 %v44
    %213 = vmatprep.subr.mxu0 0.0
    %214 = vmatpush1.msra.mxu0 0.0
    %215 = vmatprep.subr.mxu0 0.0
    %216 = vmatpush1.msra.mxu0 0.0
    %217 = vmatprep.subr.mxu0 0.0
    %218 = vmatpush1.msra.mxu0 0.0
    %219 = vmatprep.subr.mxu0 0.0
    %220 = vmatpush1.msra.mxu0 0.0
    %221 = vmatprep.subr.mxu0 0.0
    %222 = vmatpush1.msra.mxu0 0.0
    %223 = vmatprep.subr.mxu0 0.0
    %224 = vmatpush1.msra.mxu0 0.0
    %225 = vmatprep.subr.mxu0 0.0
    %226 = vmatpush1.msra.mxu0 0.0
    %227 = vmatprep.subr.mxu0 0.0
    %228 = vmatpush1.msra.mxu0 0.0
    %229 = vmatprep.subr.mxu0 0.0
    %230 = vmatpush1.msra.mxu0 0.0
    %231 = vmatprep.subr.mxu0 0.0
    %232 = vmatpush1.msra.mxu0 0.0
    %233 = vmatprep.subr.mxu0 0.0
    %234 = vmatpush1.msra.mxu0 0.0
    %235 = vmatprep.subr.mxu0 0.0
    %236 = vmatpush1.msra.mxu0 0.0
    %237 = vmatprep.subr.mxu0 0.0
    %238 = vmatpush1.msra.mxu0 0.0
    %239 = vmatprep.subr.mxu0 0.0
    %240 = vmatpush1.msra.mxu0 0.0
    %241 = vmatprep.subr.mxu0 0.0
    %242 = vmatpush1.msra.mxu0 0.0
    %243 = vmatprep.subr.mxu0 0.0
    %244 = vmatpush1.msra.mxu0 0.0
    %245 = vmatprep.subr.mxu0 0.0
    %246 = vmatpush1.msra.mxu0 0.0
    %247 = vmatprep.subr.mxu0 0.0
    %248 = vmatpush1.msra.mxu0 0.0
    %249 = vmatprep.subr.mxu0 0.0
    %250 = vmatpush1.msra.mxu0 0.0
    %251 = vmatprep.subr.mxu0 0.0
    %252 = vmatpush1.msra.mxu0 0.0
    %253 = vmatprep.subr.mxu0 0.0
    %254 = vmatpush1.msra.mxu0 0.0
    %255 = vmatprep.subr.mxu0 0.0
    %256 = vmatpush1.msra.mxu0 0.0
    %257 = vmatprep.subr.mxu0 0.0
    %258 = vmatpush1.msra.mxu0 0.0
    %259 = vmatprep.subr.mxu0 0.0
    %260 = vmatpush1.msra.mxu0 0.0
    %261 = vmatprep.subr.mxu0 0.0
    %262 = vmatpush1.msra.mxu0 0.0
    %263 = vmatprep.subr.mxu0 0.0
    %264 = vmatpush1.msra.mxu0 0.0
    %265 = vmatprep.subr.mxu0 0.0
    %266 = vmatpush1.msra.mxu0 0.0
    %267 = vmatprep.subr.mxu0 0.0
    %268 = vmatpush1.msra.mxu0 0.0
    %269 = vmatprep.subr.mxu0 0.0
    %270 = vmatpush1.msra.mxu0 0.0
    %271 = vmatprep.subr.mxu0 0.0
    %272 = vmatpush1.msra.mxu0 0.0
    %273 = vmatprep.mubr.f32.mxu0 0.0
    %274 = vmatmul.mubr.f32.gmra.mrb[0].mxu0 %v207
    %v275 = vpop.f32.mrb[0].mxu0
    %v276 = vadd.f32 0.0, %v275
    %v277 = vpop.f32.mrb[0].mxu0
    %278 = vdwg.mxu0
    %v280 = vsel %vm205, %v202, 0
    %282 = vmatprep.subr.mxu0 0.0
    %283 = vmatpush1.msra.mxu0 %v45
    %284 = vmatprep.subr.mxu0 0.0
    %285 = vmatpush1.msra.mxu0 %v46
    %286 = vmatprep.subr.mxu0 0.0
    %287 = vmatpush1.msra.mxu0 0.0
    %288 = vmatprep.subr.mxu0 0.0
    %289 = vmatpush1.msra.mxu0 0.0
    %290 = vmatprep.subr.mxu0 0.0
    %291 = vmatpush1.msra.mxu0 0.0
    %292 = vmatprep.subr.mxu0 0.0
    %293 = vmatpush1.msra.mxu0 0.0
    %294 = vmatprep.subr.mxu0 0.0
    %295 = vmatpush1.msra.mxu0 0.0
    %296 = vmatprep.subr.mxu0 0.0
    %297 = vmatpush1.msra.mxu0 0.0
    %298 = vmatprep.subr.mxu0 0.0
    %299 = vmatpush1.msra.mxu0 0.0
    %300 = vmatprep.subr.mxu0 0.0
    %301 = vmatpush1.msra.mxu0 0.0
    %302 = vmatprep.subr.mxu0 0.0
    %303 = vmatpush1.msra.mxu0 0.0
    %304 = vmatprep.subr.mxu0 0.0
    %305 = vmatpush1.msra.mxu0 0.0
    %306 = vmatprep.subr.mxu0 0.0
    %307 = vmatpush1.msra.mxu0 0.0
    %308 = vmatprep.subr.mxu0 0.0
    %309 = vmatpush1.msra.mxu0 0.0
    %310 = vmatprep.subr.mxu0 0.0
    %311 = vmatpush1.msra.mxu0 0.0
    %312 = vmatprep.subr.mxu0 0.0
    %313 = vmatpush1.msra.mxu0 0.0
    %314 = vmatprep.subr.mxu0 0.0
    %315 = vmatpush1.msra.mxu0 0.0
    %316 = vmatprep.subr.mxu0 0.0
    %317 = vmatpush1.msra.mxu0 0.0
    %318 = vmatprep.subr.mxu0 0.0
    %319 = vmatpush1.msra.mxu0 0.0
    %320 = vmatprep.subr.mxu0 0.0
    %321 = vmatpush1.msra.mxu0 0.0
    %322 = vmatprep.subr.mxu0 0.0
    %323 = vmatpush1.msra.mxu0 0.0
    %324 = vmatprep.subr.mxu0 0.0
    %325 = vmatpush1.msra.mxu0 0.0
    %326 = vmatprep.subr.mxu0 0.0
    %327 = vmatpush1.msra.mxu0 0.0
    %328 = vmatprep.subr.mxu0 0.0
    %329 = vmatpush1.msra.mxu0 0.0
    %330 = vmatprep.subr.mxu0 0.0
    %331 = vmatpush1.msra.mxu0 0.0
    %332 = vmatprep.subr.mxu0 0.0
    %333 = vmatpush1.msra.mxu0 0.0
    %334 = vmatprep.subr.mxu0 0.0
    %335 = vmatpush1.msra.mxu0 0.0
    %336 = vmatprep.subr.mxu0 0.0
    %337 = vmatpush1.msra.mxu0 0.0
    %338 = vmatprep.subr.mxu0 0.0
    %339 = vmatpush1.msra.mxu0 0.0
    %340 = vmatprep.subr.mxu0 0.0
    %341 = vmatpush1.msra.mxu0 0.0
    %342 = vmatprep.subr.mxu0 0.0
    %343 = vmatpush1.msra.mxu0 0.0
    %344 = vmatprep.subr.mxu0 0.0
    %345 = vmatpush1.msra.mxu0 0.0
    %346 = vmatprep.mubr.f32.mxu0 0.0
    %347 = vmatmul.mubr.f32.gmra.mrb[0].mxu0 %v280
    %v348 = vpop.f32.mrb[0].mxu0
    %v349 = vadd.f32 0.0, %v348
    %v350 = vpop.f32.mrb[0].mxu0
    %351 = vdwg.mxu0
    %352 = vst [vmem:[#allocation7] sm:$0xf] %v276
    %353 = vst [vmem:[#allocation7 + $0x4] sm:$0xf] %v349
    // Predicated region
    $region22: #{tpu_custom_call.1} parent=1 // pred_check
      _
    $region23: #{tpu_custom_call.1} parent=1 // pred_check_branch
      %355 = sbr.rel (0) target = $region25
    $region24: #{tpu_custom_call.1} parent=1 // pred_region
      %s357 = ssub.s32 128, 128
      %358 = vsyncadd [#allocation4], %s357
      %s359 = sshll.u32 [#allocation7], 4
      %s360 = int_to_ptr.vmem [resolvable:$true] %s359
      %365 = dma.vmem_to_hbm [thread:$0]  %s360, 128, %s3, [#allocation4], 64, 64, 4
    $region25: #{tpu_custom_call.1} parent=1 // pred_fallthru
      _
    // Predicated region
    $region26: #{tpu_custom_call.1} parent=1 // pred_check
      _
    $region27: #{tpu_custom_call.1} parent=1 // pred_check_branch
      %367 = sbr.rel (0) target = $region29
    $region28: #{tpu_custom_call.1} parent=1 // pred_region
      %368 = dma.done [#allocation4], 128
    $region29: #{tpu_custom_call.1} parent=1 // pred_fallthru
      _
    %369 = vsyncpa [#allocation3], 1
    %370 = vsyncpa [#allocation6], 1
    %371 = vsyncpa [#allocation4], 1

</llo_original>
